<compile_context>
chip_gen: v7x
topology: tpu7x:2x2x1
jax: 0.10.0
libtpu: 0.0.40
codegen_flags: <defaults>
</compile_context>

<pallas_src>
import math

import jax
import jax.numpy as jnp
from jax.experimental import pallas as pl
from jax.experimental.pallas import tpu as pltpu

EPS_LN = 1e-5


def _round_up(x, m):
    return (x + m - 1) // m * m


# ------------------------------ kernel ---------------------------------------


def pred_traj_mlp_kernel(x_ref, w1_ref, ln_ref, w2_ref, b2_ref, o_ref):
    """One row-tile of: Linear -> LayerNorm -> ReLU -> Linear."""
    x = x_ref[...]                                          # [tm, cin] bf16

    # Linear(in_channels, hidden) -- MXU bf16 operands, f32 accumulation.
    h = jnp.dot(x, w1_ref[...], preferred_element_type=jnp.float32)

    ln = ln_ref[...]                                        # [3, hid] f32
    b1 = ln[0:1, :]
    gamma = ln[1:2, :]
    beta = ln[2:3, :]
    h = h + b1

    # LayerNorm(hidden): single-pass biased statistics, all in f32.
    inv_h = jnp.float32(1.0 / h.shape[-1])
    s1 = jnp.sum(h, axis=-1, keepdims=True)
    s2 = jnp.sum(h * h, axis=-1, keepdims=True)
    mu = s1 * inv_h
    var = jnp.maximum(s2 * inv_h - mu * mu, 0.0)
    h = (h - mu) * jax.lax.rsqrt(var + EPS_LN)
    h = h * gamma + beta

    # ReLU
    h = jnp.maximum(h, 0.0)

    # Linear(hidden, out_channels) -- bf16 operands, f32 accumulation.
    out = jnp.dot(h.astype(w2_ref.dtype), w2_ref[...],
                  preferred_element_type=jnp.float32) + b2_ref[...]
    o_ref[...] = out.astype(o_ref.dtype)


# --------------------------- param preparation --------------------------------


def prepare_pred_traj_mlp_params(w1, b1, gamma, beta, w2, b2,
                                 compute_dtype=jnp.bfloat16):
    """Cast / pack parameters once at init time (hoisted out of the call path)."""
    f32 = jnp.float32
    cout = w2.shape[1]
    # b1, gamma, beta share the hidden width -> one (3, hid) block, one DMA.
    ln = jnp.stack(
        [b1.astype(f32), gamma.astype(f32), beta.astype(f32)], axis=0)
    return dict(
        w1=w1.astype(compute_dtype),
        ln=ln,
        w2=w2.astype(compute_dtype),
        b2=b2.astype(f32).reshape(1, cout),
        compute_dtype=compute_dtype,
    )


# ------------------------------ wrapper ---------------------------------------


def pred_traj_mlp(x, params, *, max_block_m=512):
    """x: [..., in_channels] -> [..., out_channels] (PyTorch nn.Linear semantics)."""
    lead = x.shape[:-1]
    cin = x.shape[-1]
    w1, ln, w2, b2 = params["w1"], params["ln"], params["w2"], params["b2"]
    compute_dtype = params["compute_dtype"]
    hid = w1.shape[1]
    cout = w2.shape[1]

    m = math.prod(lead) if lead else 1
    x2 = x.reshape(m, cin)
    if x2.dtype != compute_dtype:
        x2 = x2.astype(compute_dtype)

    # Row tile: as large as max_block_m, rounded to 8 sublanes, but capped so
    # the row grid keeps >= 2 steps when m > 8 (v7x megacore utilization).
    block_m = min(max_block_m, _round_up(m, 8))
    if m > 8:
        block_m = min(block_m, max(8, _round_up((m + 1) // 2, 8)))
    grid_m = pl.cdiv(m, block_m)

    out = pl.pallas_call(
        pred_traj_mlp_kernel,
        out_shape=jax.ShapeDtypeStruct((m, cout), jnp.float32),
        grid_spec=pltpu.PrefetchScalarGridSpec(
            num_scalar_prefetch=0,
            grid=(grid_m,),
            in_specs=[
                pl.BlockSpec((block_m, cin), lambda i: (i, 0)),   # x row tile
                pl.BlockSpec((cin, hid), lambda i: (0, 0)),       # w1 (resident)
                pl.BlockSpec((3, hid), lambda i: (0, 0)),         # [b1;gamma;beta]
                pl.BlockSpec((hid, cout), lambda i: (0, 0)),      # w2 (resident)
                pl.BlockSpec((1, cout), lambda i: (0, 0)),        # b2
            ],
            out_specs=pl.BlockSpec((block_m, cout), lambda i: (i, 0)),
        ),
        compiler_params=pltpu.CompilerParams(
            dimension_semantics=("parallel",)),
    )(x2, w1, ln, w2, b2)

    return out.reshape(*lead, cout)


# ------------------------------ main ------------------------------------------


if __name__ == "__main__":
    key = jax.random.PRNGKey(0)

    B = 8          # batch of agents
    C_IN = 16      # in_channels
    HIDDEN = 32    # hidden_state
    C_OUT = 12     # out_channels (e.g. 6 future steps x 2)

    ks = jax.random.split(key, 7)
    x = jax.random.normal(ks[0], (B, C_IN), jnp.float32)
    w1 = 0.1 * jax.random.normal(ks[1], (C_IN, HIDDEN), jnp.float32)
    b1 = 0.1 * jax.random.normal(ks[2], (HIDDEN,), jnp.float32)
    gamma = 1.0 + 0.1 * jax.random.normal(ks[3], (HIDDEN,), jnp.float32)
    beta = 0.1 * jax.random.normal(ks[4], (HIDDEN,), jnp.float32)
    w2 = 0.1 * jax.random.normal(ks[5], (HIDDEN, C_OUT), jnp.float32)
    b2 = 0.1 * jax.random.normal(ks[6], (C_OUT,), jnp.float32)

    params = prepare_pred_traj_mlp_params(w1, b1, gamma, beta, w2, b2)

    out = jax.block_until_ready(pred_traj_mlp(x, params))

    # Pure-JAX reference with PyTorch semantics (two-pass LayerNorm).
    def reference(xq, w1q, w2q):
        h = jnp.dot(xq, w1q, preferred_element_type=jnp.float32) + b1
        mu = jnp.mean(h, axis=-1, keepdims=True)
        var = jnp.mean((h - mu) ** 2, axis=-1, keepdims=True)
        h = (h - mu) * jax.lax.rsqrt(var + EPS_LN) * gamma + beta
        h = jnp.maximum(h, 0.0)
        return jnp.dot(h.astype(w2q.dtype), w2q,
                       preferred_element_type=jnp.float32) + b2

    bf16 = jnp.bfloat16
    # Mirror reference (same bf16 operand precision as the kernel): tight check.
    ref_bf16 = reference(x.astype(bf16), w1.astype(bf16), w2.astype(bf16))
    # Full-f32 PyTorch-semantics reference: loose (bf16-operand-level) check.
    ref_f32 = reference(x, w1, w2)

    assert out.shape == (B, C_OUT)
    assert bool(jnp.all(jnp.isfinite(out)))
    assert bool(jnp.allclose(out, ref_bf16, atol=2e-3, rtol=2e-3))
    assert bool(jnp.allclose(out, ref_f32, atol=3e-2, rtol=3e-2))

    # Ragged batch: exercises the partial last row block of the cdiv grid
    # (out-of-range rows are never written back; LayerNorm is rowwise).
    x_odd = jax.random.normal(jax.random.PRNGKey(1), (10, C_IN), jnp.float32)
    out_odd = jax.block_until_ready(pred_traj_mlp(x_odd, params))
    ref_odd = reference(x_odd.astype(bf16), w1.astype(bf16), w2.astype(bf16))
    assert out_odd.shape == (10, C_OUT)
    assert bool(jnp.all(jnp.isfinite(out_odd)))
    assert bool(jnp.allclose(out_odd, ref_odd, atol=2e-3, rtol=2e-3))

    print("KERNEL_OK")
</pallas_src>

<mosaic_0001>
module attributes {stable_mosaic.version = 11 : i64} {
  func.func @pred_traj_mlp_kernel(%arg0: i32, %arg1: memref<8x16xbf16, #tpu.memory_space<vmem>>, %arg2: memref<16x32xbf16, #tpu.memory_space<vmem>>, %arg3: memref<3x32xf32, #tpu.memory_space<vmem>>, %arg4: memref<32x12xbf16, #tpu.memory_space<vmem>>, %arg5: memref<1x12xf32, #tpu.memory_space<vmem>>, %arg6: memref<8x12xf32, #tpu.memory_space<vmem>>) attributes {dimension_semantics = [#tpu.dimension_semantics<parallel>], iteration_bounds = array<i64: 1>, scalar_prefetch = 0 : i64, scratch_operands = 0 : i64, tpu.core_type = #tpu.core_type<tc>, window_params = [{transform_indices = @transform_0, window_bounds = array<i64: 8, 16>}, {pipeline_mode = #tpu.pipeline_mode<synchronous>, transform_indices = @transform_1, window_bounds = array<i64: 16, 32>}, {pipeline_mode = #tpu.pipeline_mode<synchronous>, transform_indices = @transform_2, window_bounds = array<i64: 3, 32>}, {pipeline_mode = #tpu.pipeline_mode<synchronous>, transform_indices = @transform_3, window_bounds = array<i64: 32, 12>}, {pipeline_mode = #tpu.pipeline_mode<synchronous>, transform_indices = @transform_4, window_bounds = array<i64: 1, 12>}, {transform_indices = @transform_5, window_bounds = array<i64: 8, 12>}]} {
    %c0 = arith.constant 0 : index
    %c0_0 = arith.constant 0 : index
    %0 = vector.load %arg1[%c0, %c0_0] : memref<8x16xbf16, #tpu.memory_space<vmem>>, vector<8x16xbf16>
    %c0_1 = arith.constant 0 : index
    %c0_2 = arith.constant 0 : index
    %1 = vector.load %arg2[%c0_1, %c0_2] : memref<16x32xbf16, #tpu.memory_space<vmem>>, vector<16x32xbf16>
    %cst = arith.constant dense<0.000000e+00> : vector<8x32xf32>
    %2 = tpu.matmul %0, %1, %cst {dimension_numbers = #tpu.dot_dimension_numbers<[1], [0], [0], [1], [0, 0, 1, 1], [], []>} : vector<8x16xbf16>, vector<16x32xbf16>, vector<8x32xf32> -> vector<8x32xf32>
    %c0_3 = arith.constant 0 : index
    %c0_4 = arith.constant 0 : index
    %3 = vector.load %arg3[%c0_3, %c0_4] : memref<3x32xf32, #tpu.memory_space<vmem>>, vector<3x32xf32>
    %4 = vector.extract_strided_slice %3 {offsets = [0, 0], sizes = [1, 32], strides = [1, 1]} : vector<3x32xf32> to vector<1x32xf32>
    %5 = vector.extract_strided_slice %3 {offsets = [1, 0], sizes = [1, 32], strides = [1, 1]} : vector<3x32xf32> to vector<1x32xf32>
    %6 = vector.extract_strided_slice %3 {offsets = [2, 0], sizes = [1, 32], strides = [1, 1]} : vector<3x32xf32> to vector<1x32xf32>
    %7 = vector.broadcast %4 : vector<1x32xf32> to vector<8x32xf32>
    %8 = arith.addf %2, %7 : vector<8x32xf32>
    %cst_5 = arith.constant dense<0.000000e+00> : vector<8xf32>
    %9 = vector.multi_reduction <add>, %8, %cst_5 [1] : vector<8x32xf32> to vector<8xf32>
    %10 = vector.shape_cast %9 : vector<8xf32> to vector<8x1xf32>
    %11 = arith.mulf %8, %8 : vector<8x32xf32>
    %cst_6 = arith.constant dense<0.000000e+00> : vector<8xf32>
    %12 = vector.multi_reduction <add>, %11, %cst_6 [1] : vector<8x32xf32> to vector<8xf32>
    %13 = vector.shape_cast %12 : vector<8xf32> to vector<8x1xf32>
    %cst_7 = arith.constant 3.125000e-02 : f32
    %14 = vector.broadcast %cst_7 : f32 to vector<8x1xf32>
    %15 = arith.mulf %10, %14 : vector<8x1xf32>
    %cst_8 = arith.constant 3.125000e-02 : f32
    %16 = vector.broadcast %cst_8 : f32 to vector<8x1xf32>
    %17 = arith.mulf %13, %16 : vector<8x1xf32>
    %18 = arith.mulf %15, %15 : vector<8x1xf32>
    %19 = arith.subf %17, %18 : vector<8x1xf32>
    %cst_9 = arith.constant 0.000000e+00 : f32
    %20 = vector.broadcast %cst_9 : f32 to vector<8x1xf32>
    %21 = arith.maximumf %19, %20 : vector<8x1xf32>
    %22 = vector.broadcast %15 : vector<8x1xf32> to vector<8x32xf32>
    %23 = arith.subf %8, %22 : vector<8x32xf32>
    %cst_10 = arith.constant 9.99999974E-6 : f32
    %24 = vector.broadcast %cst_10 : f32 to vector<8x1xf32>
    %25 = arith.addf %21, %24 : vector<8x1xf32>
    %26 = math.rsqrt %25 : vector<8x1xf32>
    %27 = vector.broadcast %26 : vector<8x1xf32> to vector<8x32xf32>
    %28 = arith.mulf %23, %27 : vector<8x32xf32>
    %29 = vector.broadcast %5 : vector<1x32xf32> to vector<8x32xf32>
    %30 = arith.mulf %28, %29 : vector<8x32xf32>
    %31 = vector.broadcast %6 : vector<1x32xf32> to vector<8x32xf32>
    %32 = arith.addf %30, %31 : vector<8x32xf32>
    %cst_11 = arith.constant 0.000000e+00 : f32
    %33 = vector.broadcast %cst_11 : f32 to vector<8x32xf32>
    %34 = arith.maximumf %32, %33 : vector<8x32xf32>
    %35 = arith.truncf %34 : vector<8x32xf32> to vector<8x32xbf16>
    %c0_12 = arith.constant 0 : index
    %c0_13 = arith.constant 0 : index
    %36 = vector.load %arg4[%c0_12, %c0_13] : memref<32x12xbf16, #tpu.memory_space<vmem>>, vector<32x12xbf16>
    %cst_14 = arith.constant dense<0.000000e+00> : vector<8x12xf32>
    %37 = tpu.matmul %35, %36, %cst_14 {dimension_numbers = #tpu.dot_dimension_numbers<[1], [0], [0], [1], [0, 0, 1, 1], [], []>} : vector<8x32xbf16>, vector<32x12xbf16>, vector<8x12xf32> -> vector<8x12xf32>
    %c0_15 = arith.constant 0 : index
    %c0_16 = arith.constant 0 : index
    %38 = vector.load %arg5[%c0_15, %c0_16] : memref<1x12xf32, #tpu.memory_space<vmem>>, vector<1x12xf32>
    %39 = vector.broadcast %38 : vector<1x12xf32> to vector<8x12xf32>
    %40 = arith.addf %37, %39 : vector<8x12xf32>
    %c0_17 = arith.constant 0 : index
    %c0_18 = arith.constant 0 : index
    %41 = vector.load %arg6[%c0_17, %c0_18] : memref<8x12xf32, #tpu.memory_space<vmem>>, vector<8x12xf32>
    tpu.vector_store %arg6[%c0_17, %c0_18], %40 {strides = array<i32>} : memref<8x12xf32, #tpu.memory_space<vmem>>, vector<8x12xf32>,
    return
  }
  func.func @transform_0(%arg0: i32) -> (i32, i32) {
    %c0_i32 = arith.constant 0 : i32
    %c0_i32_0 = arith.constant 0 : i32
    return %arg0, %c0_i32 : i32, i32
  }
  func.func @transform_1(%arg0: i32) -> (i32, i32) {
    %c0_i32 = arith.constant 0 : i32
    %c0_i32_0 = arith.constant 0 : i32
    %c0_i32_1 = arith.constant 0 : i32
    return %c0_i32, %c0_i32_0 : i32, i32
  }
  func.func @transform_2(%arg0: i32) -> (i32, i32) {
    %c0_i32 = arith.constant 0 : i32
    %c0_i32_0 = arith.constant 0 : i32
    %c0_i32_1 = arith.constant 0 : i32
    return %c0_i32, %c0_i32_0 : i32, i32
  }
  func.func @transform_3(%arg0: i32) -> (i32, i32) {
    %c0_i32 = arith.constant 0 : i32
    %c0_i32_0 = arith.constant 0 : i32
    %c0_i32_1 = arith.constant 0 : i32
    return %c0_i32, %c0_i32_0 : i32, i32
  }
  func.func @transform_4(%arg0: i32) -> (i32, i32) {
    %c0_i32 = arith.constant 0 : i32
    %c0_i32_0 = arith.constant 0 : i32
    %c0_i32_1 = arith.constant 0 : i32
    return %c0_i32, %c0_i32_0 : i32, i32
  }
  func.func @transform_5(%arg0: i32) -> (i32, i32) {
    %c0_i32 = arith.constant 0 : i32
    %c0_i32_0 = arith.constant 0 : i32
    return %arg0, %c0_i32 : i32, i32
  }
}

</mosaic_0001>

<llo_original>
// kernel: tpu_custom_call.1
$region0: #{tpu_custom_call.1}
  #allocation0 [shape = 'u32[]', space=smem, size = 0x4, offset = 0x4, fixed_abs, tag = 'smem constant byte address 0x4 - core index']
  #allocation1 [shape = 'u32[144,128]{1,0:T(1,128)}', space=vmem, size = 0x12000, scoped, tag = 'internal scratch']
  %s0 = inlined_call_operand.vmem [shape: bf16[8,16], index: 0, kind: input, shape index: {}]
  %s1 = inlined_call_operand.vmem [shape: bf16[16,32], index: 1, kind: input, shape index: {}]
  %s2 = inlined_call_operand.vmem [shape: f32[3,32], index: 2, kind: input, shape index: {}]
  %s3 = inlined_call_operand.vmem [shape: bf16[32,12], index: 3, kind: input, shape index: {}]
  %s4 = inlined_call_operand.vmem [shape: f32[1,12], index: 4, kind: input, shape index: {}]
  %s5 = inlined_call_operand.hbm [shape: f32[8,12], index: 5, kind: output, shape index: {}]
  %s6 = sld [smem:[#allocation0]]
  $region30: #{tpu_custom_call.1} parent=0
    _
  %s8 = ssub.s32 1, %s6
  %s9 = scalar_select 0, %s8, %s6
  $region1: #{tpu_custom_call.1} parent=0
    #allocation2 [shape = 'u8[4096]{0}', space=vmem, size = 0x1000, scoped, tag = 'output window, operand 0, single buffered']
    #allocation3 [shape = 's32[1]{0}', space=sflag, size = 0x4, scoped, tag = 'scoped memory for tpu_custom_call.1']
    %10 = vsyncpa [#allocation3], 0
    // Predicated region
    $region2: #{tpu_custom_call.1} parent=1 // pred_check
      _
    $region3: #{tpu_custom_call.1} parent=1 // pred_check_branch
      %12 = sbr.rel (0) target = $region5
    $region4: #{tpu_custom_call.1} parent=1 // pred_region
      _
    $region5: #{tpu_custom_call.1} parent=1 // pred_fallthru
      _
    // Predicated region
    $region6: #{tpu_custom_call.1} parent=1 // pred_check
      _
    $region7: #{tpu_custom_call.1} parent=1 // pred_check_branch
      %14 = sbr.rel (0) target = $region9
    $region8: #{tpu_custom_call.1} parent=1 // pred_region
      _
    $region9: #{tpu_custom_call.1} parent=1 // pred_fallthru
      _
    // Predicated region
    $region10: #{tpu_custom_call.1} parent=1 // pred_check
      _
    $region11: #{tpu_custom_call.1} parent=1 // pred_check_branch
      %16 = sbr.rel (0) target = $region13
    $region12: #{tpu_custom_call.1} parent=1 // pred_region
      _
    $region13: #{tpu_custom_call.1} parent=1 // pred_fallthru
      _
    // Predicated region
    $region14: #{tpu_custom_call.1} parent=1 // pred_check
      _
    $region15: #{tpu_custom_call.1} parent=1 // pred_check_branch
      %18 = sbr.rel (0) target = $region17
    $region16: #{tpu_custom_call.1} parent=1 // pred_region
      _
    $region17: #{tpu_custom_call.1} parent=1 // pred_fallthru
      _
    // Predicated region
    $region18: #{tpu_custom_call.1} parent=1 // pred_check
      _
    $region19: #{tpu_custom_call.1} parent=1 // pred_check_branch
      %20 = sbr.rel (0) target = $region21
    $region20: #{tpu_custom_call.1} parent=1 // pred_region
      _
    $region21: #{tpu_custom_call.1} parent=1 // pred_fallthru
      _
    %v22 = vld [vmem:[%s0] sm:$0xf]
    %v23 = vld [vmem:[%s1] sm:$0xf]
    %v24 = vld [vmem:[%s1 + $0x4] sm:$0xf]
    %v25 = vld [vmem:[%s2] sm:$0x7]
    %v26 = vlaneseq
    %v27 = vshrl.u32 %v26, 7
    %v28 = vsub.s32 0, %v27
    %v29 = vrot.slane %v25, %v28
    %v32 = vunpack.c.l.b16 %v23
    %v33 = vunpack.c.l.b16 %v24
    %v34 = vpack.c.b16 %v33, %v32
    %vm36 = vcmask 130048
    %v38 = vsel %vm36, %v22, 0
    %40 = vmatprep.subr.bf16.mxu0 0
    %41 = vmatpush1.bf16.msra.mxu0 %v34
    %42 = vmatprep.subr.bf16.mxu0 0
    %43 = vmatpush1.bf16.msra.mxu0 0
    %44 = vmatprep.subr.bf16.mxu0 0
    %45 = vmatpush1.bf16.msra.mxu0 0
    %46 = vmatprep.subr.bf16.mxu0 0
    %47 = vmatpush1.bf16.msra.mxu0 0
    %48 = vmatprep.subr.bf16.mxu0 0
    %49 = vmatpush1.bf16.msra.mxu0 0
    %50 = vmatprep.subr.bf16.mxu0 0
    %51 = vmatpush1.bf16.msra.mxu0 0
    %52 = vmatprep.subr.bf16.mxu0 0
    %53 = vmatpush1.bf16.msra.mxu0 0
    %54 = vmatprep.subr.bf16.mxu0 0
    %55 = vmatpush1.bf16.msra.mxu0 0
    %56 = vmatprep.subr.bf16.mxu0 0
    %57 = vmatpush1.bf16.msra.mxu0 0
    %58 = vmatprep.subr.bf16.mxu0 0
    %59 = vmatpush1.bf16.msra.mxu0 0
    %60 = vmatprep.subr.bf16.mxu0 0
    %61 = vmatpush1.bf16.msra.mxu0 0
    %62 = vmatprep.subr.bf16.mxu0 0
    %63 = vmatpush1.bf16.msra.mxu0 0
    %64 = vmatprep.subr.bf16.mxu0 0
    %65 = vmatpush1.bf16.msra.mxu0 0
    %66 = vmatprep.subr.bf16.mxu0 0
    %67 = vmatpush1.bf16.msra.mxu0 0
    %68 = vmatprep.subr.bf16.mxu0 0
    %69 = vmatpush1.bf16.msra.mxu0 0
    %70 = vmatprep.subr.bf16.mxu0 0
    %71 = vmatpush1.bf16.msra.mxu0 0
    %72 = vmatprep.mubr.bf16.mxu0 0
    %73 = vmatmul.mubr.bf16.gmra.mrb[0].mxu0 %v38
    %v74 = vpop.f32.mrb[0].mxu0
    %v75 = vadd.f32 %v29, %v74
    %v76 = vpop.f32.mrb[0].mxu0
    %v77 = vpop.f32.mrb[0].mxu0
    %v78 = vpop.f32.mrb[0].mxu0
    %79 = vdwg.mxu0
    %vm80 = vcmask 261120
    %v81 = vsel %vm80, %v75, 0.0
    %82 = vadd.xlane.f32.xlu0 %v81
    %v83 = vpop.xlane.xlu0 %82
    %v84 = vmul.f32 %v75, %v75
    %v85 = vsel %vm80, %v84, 0.0
    %86 = vadd.xlane.f32.xlu0 %v85
    %v87 = vpop.xlane.xlu0 %86
    %v88 = vmul.f32 %v83, 0.03125
    %v89 = vmul.f32 %v87, 0.03125
    %v90 = vmul.f32 %v88, %v88
    %v91 = vsub.f32 %v89, %v90
    %v92 = vmax.f32 %v91, 0.0
    %v93 = vsub.f32 %v75, %v88
    %v94 = vadd.f32 %v92, 1e-05
    %v95 = vrsqrt.pop %v94
    %v96 = vmul.f32 %v93, %v95
    %v97 = vlaneseq
    %v98 = vshrl.u32 %v97, 7
    %v99 = vsub.s32 1, %v98
    %v100 = vrot.slane %v25, %v99
    %v101 = vmul.f32 %v96, %v100
    %v102 = vlaneseq
    %v103 = vshrl.u32 %v102, 7
    %v104 = vsub.s32 2, %v103
    %v105 = vrot.slane %v25, %v104
    %v106 = vadd.f32 %v101, %v105
    %v107 = vmax.f32 %v106, 0.0
    %v108 = vpack.c.bf16 %v107, %v107
    %v109 = vld [vmem:[%s3] sm:$0xf]
    %v110 = vld [vmem:[%s3 + $0x4] sm:$0xf]
    %v111 = vld [vmem:[%s3 + $0x8] sm:$0xf]
    %v112 = vld [vmem:[%s3 + $0xc] sm:$0xf]
    %v113 = vld [vmem:[%s4] sm:$0x1]
    %v115 = vlaneseq
    %v116 = vshrl.u32 %v115, 7
    %v117 = vsub.s32 0, %v116
    %v118 = vrot.slane %v113, %v117
    %v124 = vunpack.c.l.b16 %v109
    %v125 = vunpack.c.l.b16 %v110
    %v126 = vunpack.c.l.b16 %v111
    %v127 = vunpack.c.l.b16 %v112
    %v128 = vpack.c.b16 %v125, %v124
    %v129 = vpack.c.b16 %v127, %v126
    %v133 = vsel %vm80, %v108, 0
    %135 = vmatprep.subr.bf16.mxu0 0
    %136 = vmatpush1.bf16.msra.mxu0 %v128
    %137 = vmatprep.subr.bf16.mxu0 0
    %138 = vmatpush1.bf16.msra.mxu0 %v129
    %139 = vmatprep.subr.bf16.mxu0 0
    %140 = vmatpush1.bf16.msra.mxu0 0
    %141 = vmatprep.subr.bf16.mxu0 0
    %142 = vmatpush1.bf16.msra.mxu0 0
    %143 = vmatprep.subr.bf16.mxu0 0
    %144 = vmatpush1.bf16.msra.mxu0 0
    %145 = vmatprep.subr.bf16.mxu0 0
    %146 = vmatpush1.bf16.msra.mxu0 0
    %147 = vmatprep.subr.bf16.mxu0 0
    %148 = vmatpush1.bf16.msra.mxu0 0
    %149 = vmatprep.subr.bf16.mxu0 0
    %150 = vmatpush1.bf16.msra.mxu0 0
    %151 = vmatprep.subr.bf16.mxu0 0
    %152 = vmatpush1.bf16.msra.mxu0 0
    %153 = vmatprep.subr.bf16.mxu0 0
    %154 = vmatpush1.bf16.msra.mxu0 0
    %155 = vmatprep.subr.bf16.mxu0 0
    %156 = vmatpush1.bf16.msra.mxu0 0
    %157 = vmatprep.subr.bf16.mxu0 0
    %158 = vmatpush1.bf16.msra.mxu0 0
    %159 = vmatprep.subr.bf16.mxu0 0
    %160 = vmatpush1.bf16.msra.mxu0 0
    %161 = vmatprep.subr.bf16.mxu0 0
    %162 = vmatpush1.bf16.msra.mxu0 0
    %163 = vmatprep.subr.bf16.mxu0 0
    %164 = vmatpush1.bf16.msra.mxu0 0
    %165 = vmatprep.subr.bf16.mxu0 0
    %166 = vmatpush1.bf16.msra.mxu0 0
    %167 = vmatprep.mubr.bf16.mxu0 0
    %168 = vmatmul.mubr.bf16.gmra.mrb[0].mxu0 %v133
    %v169 = vpop.f32.mrb[0].mxu0
    %v170 = vadd.f32 %v118, %v169
    %v171 = vpop.f32.mrb[0].mxu0
    %v172 = vpop.f32.mrb[0].mxu0
    %v173 = vpop.f32.mrb[0].mxu0
    %174 = vdwg.mxu0
    %vm175 = vcmask 97280
    %176 = vst.msk [vmem:[#allocation2] sm:$0xff] %vm175, %v170
    // Predicated region
    $region22: #{tpu_custom_call.1} parent=1 // pred_check
      _
    $region23: #{tpu_custom_call.1} parent=1 // pred_check_branch
      %178 = sbr.rel (0) target = $region25
    $region24: #{tpu_custom_call.1} parent=1 // pred_region
      %s180 = ssub.s32 128, 128
      %181 = vsyncadd [#allocation3], %s180
      %s183 = sshll.u32 [#allocation2], 4
      %s184 = int_to_ptr.vmem [resolvable:$true] %s183
      %186 = dma.vmem_to_hbm [thread:$0]  %s184, 128, %s5, [#allocation3]
    $region25: #{tpu_custom_call.1} parent=1 // pred_fallthru
      _
    // Predicated region
    $region26: #{tpu_custom_call.1} parent=1 // pred_check
      _
    $region27: #{tpu_custom_call.1} parent=1 // pred_check_branch
      %188 = sbr.rel (0) target = $region29
    $region28: #{tpu_custom_call.1} parent=1 // pred_region
      %189 = dma.done [#allocation3], 128
    $region29: #{tpu_custom_call.1} parent=1 // pred_fallthru
      _
    %190 = vsyncpa [#allocation3], 1

</llo_original>
